<compile_context>
chip_gen: v5e
topology: v5e:2x2
jax: 0.10.0
libtpu: 0.0.40
codegen_flags: <defaults>
</compile_context>

<pallas_src>
import functools

import jax
import jax.numpy as jnp
from jax.experimental import pallas as pl
from jax.experimental.pallas import tpu as pltpu


def _round_up(x, m):
    return (x + m - 1) // m * m


# ----------------------------------- kernel -----------------------------------

def fm_kernel(x_ref, vext_ref, nhs_ref, ssq_ref, slin_ref, b_ref, o_ref, *, mxu_dtype):
    f32 = jnp.float32
    x = x_ref[...]                                   # (tile_p, pack*n), HBM dtype
    xm = x.astype(mxu_dtype)                         # in-VMEM cast (no-op if same)

    # One fused MXU push: per group g, columns [g*(k+1), g*(k+1)+k) are x_g @ V,
    # column g*(k+1)+k is x_g @ w.
    xvw = jnp.dot(xm, vext_ref[...], preferred_element_type=f32)   # (tile_p, pack*(k+1))

    # Quadratic correction: (x*x) @ (-0.5 * sum_k V^2), block-diag over groups.
    # Square in native dtype (bf16 ok on v6e/v7x); accumulate in f32.
    x2 = (x * x).astype(f32)
    quad = jnp.dot(x2, nhs_ref[...], preferred_element_type=f32)   # (tile_p, pack)

    # Per-group reductions via tiny selector matmuls (dense lanes, no VPU
    # cross-lane reduce): ssq has 0.5 at each group's V columns, slin has 1.0
    # at each group's linear column.
    inter = jnp.dot(xvw * xvw, ssq_ref[...], preferred_element_type=f32)  # 0.5*sum((xV)^2)
    lin = jnp.dot(xvw, slin_ref[...], preferred_element_type=f32)         # x @ w

    o_ref[...] = (inter + quad + lin + b_ref[0]).astype(o_ref.dtype)


# ---------------------------------- wrapper -----------------------------------

def _est_vmem_bytes(tile_p, pack, n, kp1, x_itemsize, mxu_itemsize):
    """Conservative per-step VMEM estimate (lane-padded f32 intermediates)."""
    lane = 128
    per_row = (2 * pack * n * x_itemsize                   # x tile, double-buffered
               + pack * n * (mxu_itemsize + 4)             # in-kernel cast + x^2
               + 2 * _round_up(pack * kp1, lane) * 4       # xvw, xvw^2
               + 4 * _round_up(pack, lane) * 4)            # quad/inter/lin/out
    return tile_p * per_row + (1 << 20)                    # params + slack


def torch_fm_forward(x, V, lin_w, lin_b, *, tile_b=8192, mxu_dtype=None,
                     vmem_limit_bytes=None, max_pack=8):
    """TorchFM forward.  x: (B, n); V: (n, k); lin_w: (1, n); lin_b: (1,) -> (B, 1) f32.

    x is consumed in its HBM dtype (pass bf16 x upstream to halve HBM traffic);
    mxu_dtype=None means "use x.dtype" (exact f32 semantics for f32 inputs).
    """
    B, n = x.shape
    nv, k = V.shape
    assert nv == n and lin_w.shape == (1, n)
    f32 = jnp.float32
    mxu_dtype = x.dtype if mxu_dtype is None else mxu_dtype
    if vmem_limit_bytes is None:
        vmem_limit_bytes = 48 * 1024 * 1024     # > v5e/v6e scoped defaults, < v7x physical

    # ---- lane packing: `pack` batch rows per lane-row (free row-major view) ----
    pack = 1
    for p in (8, 4, 2):
        if p <= max_pack and B % p == 0 and p * n <= 256:
            pack = p
            break
    kp1 = k + 1
    P = B // pack
    xp = x.reshape(P, pack * n)                 # pure reshape, no HBM copy

    # ---- one-time parameter preprocessing (tiny, left to XLA) ----
    V32 = V.astype(f32)
    vw = jnp.concatenate([V32, lin_w.reshape(n, 1).astype(f32)], axis=1)        # (n, k+1)
    s = -0.5 * jnp.sum(V32 * V32, axis=1)                                       # (n,)
    eye = jnp.eye(pack, dtype=f32)
    v_ext = jnp.einsum('gh,nc->gnhc', eye, vw).reshape(pack * n, pack * kp1)
    v_ext = v_ext.astype(mxu_dtype)                                             # block-diag [V|w]
    nhs = jnp.einsum('gh,n->gnh', eye, s).reshape(pack * n, pack)               # f32 (accuracy)
    sq_base = jnp.concatenate([jnp.full((k,), 0.5, f32), jnp.zeros((1,), f32)])
    lin_base = jnp.concatenate([jnp.zeros((k,), f32), jnp.ones((1,), f32)])
    s_sq = jnp.einsum('gh,c->gch', eye, sq_base).reshape(pack * kp1, pack)
    s_lin = jnp.einsum('gh,c->gch', eye, lin_base).reshape(pack * kp1, pack)
    bias = lin_b.reshape(1).astype(f32)                                         # SMEM scalar

    # ---- batch tiling (packed rows); sublane multiple 16 is safe for f32/bf16 ----
    sub = 16
    tile_p = max(sub, min(_round_up(pl.cdiv(tile_b, pack), sub), _round_up(P, sub)))
    if P >= 2 * sub:                             # >=2 grid steps so v7x's 2 TCs both work
        tile_p = min(tile_p, _round_up(pl.cdiv(P, 2), sub))
    x_isz = jnp.dtype(x.dtype).itemsize
    m_isz = jnp.dtype(mxu_dtype).itemsize
    budget = int(0.8 * vmem_limit_bytes)
    while tile_p > sub and _est_vmem_bytes(tile_p, pack, n, kp1, x_isz, m_isz) > budget:
        tile_p = max(sub, _round_up(tile_p // 2, sub))
    grid = (pl.cdiv(P, tile_p),)                 # no jnp.pad: OOB tail is masked by Pallas

    cost = pl.CostEstimate(
        flops=int(2 * B * n * (k + 2) + 4 * B * kp1),
        transcendentals=0,
        bytes_accessed=int(B * n * x_isz + B * 4
                           + pack * n * (pack * kp1) * m_isz + pack * n * pack * 4),
    )

    out = pl.pallas_call(
        functools.partial(fm_kernel, mxu_dtype=mxu_dtype),
        out_shape=jax.ShapeDtypeStruct((P, pack), f32),
        grid=grid,
        in_specs=[
            pl.BlockSpec((tile_p, pack * n), lambda i: (i, 0)),        # x tile (streamed)
            pl.BlockSpec((pack * n, pack * kp1), lambda i: (0, 0)),    # block-diag [V|w]
            pl.BlockSpec((pack * n, pack), lambda i: (0, 0)),          # -0.5*sum_k V^2 (f32)
            pl.BlockSpec((pack * kp1, pack), lambda i: (0, 0)),        # 0.5-selector
            pl.BlockSpec((pack * kp1, pack), lambda i: (0, 0)),        # linear-col selector
            pl.BlockSpec(memory_space=pltpu.MemorySpace.SMEM),         # bias scalar
        ],
        out_specs=pl.BlockSpec((tile_p, pack), lambda i: (i, 0)),
        compiler_params=pltpu.CompilerParams(
            dimension_semantics=("parallel",),
            vmem_limit_bytes=vmem_limit_bytes,
        ),
        cost_estimate=cost,
    )(xp, v_ext, nhs, s_sq, s_lin, bias)

    return out.reshape(B, 1)


# ---------------------------- pure-JAX references ----------------------------

def fm_reference(x, V, lin_w, lin_b):
    """Torch-style reference (same op order as TorchFM.forward), f32."""
    hp = jax.lax.Precision.HIGHEST
    out1 = jnp.sum(jnp.square(jnp.dot(x, V, precision=hp)), axis=1, keepdims=True)
    out2 = jnp.sum(jnp.dot(jnp.square(x), jnp.square(V), precision=hp),
                   axis=1, keepdims=True)
    lin = jnp.dot(x, lin_w.T, precision=hp) + lin_b
    return 0.5 * (out1 - out2) + lin


def fm_reference_mirror(x, V, lin_w, lin_b, mxu_dtype):
    """Mirrors the kernel's algebra and dtype rounding (like-for-like check)."""
    f32 = jnp.float32
    n, k = V.shape
    xr = x.astype(mxu_dtype)
    vw = jnp.concatenate([V.astype(f32), lin_w.reshape(n, 1).astype(f32)],
                         axis=1).astype(mxu_dtype)
    xvw = jnp.dot(xr, vw, preferred_element_type=f32).astype(f32)
    nhs = -0.5 * jnp.sum(V.astype(f32) ** 2, axis=1, keepdims=True)     # f32, like kernel
    x2 = (xr * xr).astype(f32)                                          # square in mxu dtype
    quad = x2 @ nhs
    inter = 0.5 * jnp.sum(jnp.square(xvw[:, :k]), axis=1, keepdims=True)
    return inter + quad + xvw[:, k:k + 1] + lin_b.reshape(1, 1).astype(f32)


if __name__ == "__main__":
    # Small shapes consistent with the module: batch=256, n=32 features, k=8 factors.
    B, n, k = 256, 32, 8
    key = jax.random.PRNGKey(0)
    kx, kv, kw, kb = jax.random.split(key, 4)

    x = jax.random.normal(kx, (B, n), dtype=jnp.float32)
    V = jax.random.normal(kv, (n, k), dtype=jnp.float32)            # TorchFM.V ~ randn(n, k)
    lin_w = jax.random.normal(kw, (1, n), dtype=jnp.float32) * 0.1  # nn.Linear(n, 1).weight
    lin_b = jax.random.normal(kb, (1,), dtype=jnp.float32) * 0.1    # nn.Linear(n, 1).bias

    # --- f32 path (exact module semantics). B=256 -> pack=8, 2 parallel grid steps ---
    out = jax.block_until_ready(torch_fm_forward(x, V, lin_w, lin_b))
    assert out.shape == (B, 1)
    ref = fm_reference(x, V, lin_w, lin_b)
    mir = fm_reference_mirror(x, V, lin_w, lin_b, jnp.float32)
    assert jnp.allclose(out, ref, atol=0.5, rtol=2e-2), float(jnp.max(jnp.abs(out - ref)))
    assert jnp.allclose(out, mir, atol=2e-2, rtol=2e-3), float(jnp.max(jnp.abs(out - mir)))

    # --- ragged batch (B=250 -> pack=2, tail-masked last step) and tiny batch (pack=1) ---
    for Bo in (250, 7):
        xo = x[:Bo]
        oo = jax.block_until_ready(torch_fm_forward(xo, V, lin_w, lin_b))
        ro = fm_reference(xo, V, lin_w, lin_b)
        assert oo.shape == (Bo, 1)
        assert jnp.allclose(oo, ro, atol=0.5, rtol=2e-2), \
            (Bo, float(jnp.max(jnp.abs(oo - ro))))

    # --- bf16-upstream path: x already bf16 in HBM, no wrapper-side cast/copy ---
    xb = x.astype(jnp.bfloat16)
    ob = jax.block_until_ready(torch_fm_forward(xb, V, lin_w, lin_b))
    mb = fm_reference_mirror(xb, V, lin_w, lin_b, jnp.bfloat16)
    assert ob.shape == (B, 1)
    assert jnp.allclose(ob, mb, atol=1e-1, rtol=5e-2), float(jnp.max(jnp.abs(ob - mb)))

    print("KERNEL_OK")
</pallas_src>

<mosaic_0001>
module attributes {stable_mosaic.version = 11 : i64} {
  func.func @fm_kernel(%arg0: i32, %arg1: memref<16x256xf32, #tpu.memory_space<vmem>>, %arg2: memref<256x72xf32, #tpu.memory_space<vmem>>, %arg3: memref<256x8xf32, #tpu.memory_space<vmem>>, %arg4: memref<72x8xf32, #tpu.memory_space<vmem>>, %arg5: memref<72x8xf32, #tpu.memory_space<vmem>>, %arg6: memref<1xf32, #tpu.memory_space<smem>>, %arg7: memref<16x8xf32, #tpu.memory_space<vmem>>) attributes {dimension_semantics = [#tpu.dimension_semantics<parallel>], iteration_bounds = array<i64: 2>, scalar_prefetch = 0 : i64, scratch_operands = 0 : i64, tpu.core_type = #tpu.core_type<tc>, window_params = [{transform_indices = @transform_0, window_bounds = array<i64: 16, 256>}, {pipeline_mode = #tpu.pipeline_mode<synchronous>, transform_indices = @transform_1, window_bounds = array<i64: 256, 72>}, {pipeline_mode = #tpu.pipeline_mode<synchronous>, transform_indices = @transform_2, window_bounds = array<i64: 256, 8>}, {pipeline_mode = #tpu.pipeline_mode<synchronous>, transform_indices = @transform_3, window_bounds = array<i64: 72, 8>}, {pipeline_mode = #tpu.pipeline_mode<synchronous>, transform_indices = @transform_4, window_bounds = array<i64: 72, 8>}, {transform_indices = @transform_5, window_bounds = array<i64: 1>}, {transform_indices = @transform_6, window_bounds = array<i64: 16, 8>}]} {
    %c0 = arith.constant 0 : index
    %c0_0 = arith.constant 0 : index
    %0 = vector.load %arg1[%c0, %c0_0] : memref<16x256xf32, #tpu.memory_space<vmem>>, vector<16x256xf32>
    %c0_1 = arith.constant 0 : index
    %c0_2 = arith.constant 0 : index
    %1 = vector.load %arg2[%c0_1, %c0_2] : memref<256x72xf32, #tpu.memory_space<vmem>>, vector<256x72xf32>
    %cst = arith.constant dense<0.000000e+00> : vector<16x72xf32>
    %2 = tpu.matmul %0, %1, %cst {dimension_numbers = #tpu.dot_dimension_numbers<[1], [0], [0], [1], [0, 0, 1, 1], [], []>} : vector<16x256xf32>, vector<256x72xf32>, vector<16x72xf32> -> vector<16x72xf32>
    %3 = arith.mulf %0, %0 : vector<16x256xf32>
    %c0_3 = arith.constant 0 : index
    %c0_4 = arith.constant 0 : index
    %4 = vector.load %arg3[%c0_3, %c0_4] : memref<256x8xf32, #tpu.memory_space<vmem>>, vector<256x8xf32>
    %cst_5 = arith.constant dense<0.000000e+00> : vector<16x8xf32>
    %5 = tpu.matmul %3, %4, %cst_5 {dimension_numbers = #tpu.dot_dimension_numbers<[1], [0], [0], [1], [0, 0, 1, 1], [], []>} : vector<16x256xf32>, vector<256x8xf32>, vector<16x8xf32> -> vector<16x8xf32>
    %6 = arith.mulf %2, %2 : vector<16x72xf32>
    %c0_6 = arith.constant 0 : index
    %c0_7 = arith.constant 0 : index
    %7 = vector.load %arg4[%c0_6, %c0_7] : memref<72x8xf32, #tpu.memory_space<vmem>>, vector<72x8xf32>
    %cst_8 = arith.constant dense<0.000000e+00> : vector<16x8xf32>
    %8 = tpu.matmul %6, %7, %cst_8 {dimension_numbers = #tpu.dot_dimension_numbers<[1], [0], [0], [1], [0, 0, 1, 1], [], []>} : vector<16x72xf32>, vector<72x8xf32>, vector<16x8xf32> -> vector<16x8xf32>
    %c0_9 = arith.constant 0 : index
    %c0_10 = arith.constant 0 : index
    %9 = vector.load %arg5[%c0_9, %c0_10] : memref<72x8xf32, #tpu.memory_space<vmem>>, vector<72x8xf32>
    %cst_11 = arith.constant dense<0.000000e+00> : vector<16x8xf32>
    %10 = tpu.matmul %2, %9, %cst_11 {dimension_numbers = #tpu.dot_dimension_numbers<[1], [0], [0], [1], [0, 0, 1, 1], [], []>} : vector<16x72xf32>, vector<72x8xf32>, vector<16x8xf32> -> vector<16x8xf32>
    %11 = arith.addf %8, %5 : vector<16x8xf32>
    %12 = arith.addf %11, %10 : vector<16x8xf32>
    %c0_12 = arith.constant 0 : index
    %13 = memref.load %arg6[%c0_12] : memref<1xf32, #tpu.memory_space<smem>>
    %14 = vector.broadcast %13 : f32 to vector<16x8xf32>
    %15 = arith.addf %12, %14 : vector<16x8xf32>
    %c0_13 = arith.constant 0 : index
    %c0_14 = arith.constant 0 : index
    %16 = vector.load %arg7[%c0_13, %c0_14] : memref<16x8xf32, #tpu.memory_space<vmem>>, vector<16x8xf32>
    tpu.vector_store %arg7[%c0_13, %c0_14], %15 {strides = array<i32>} : memref<16x8xf32, #tpu.memory_space<vmem>>, vector<16x8xf32>,
    return
  }
  func.func @transform_0(%arg0: i32) -> (i32, i32) {
    %c0_i32 = arith.constant 0 : i32
    %c0_i32_0 = arith.constant 0 : i32
    return %arg0, %c0_i32 : i32, i32
  }
  func.func @transform_1(%arg0: i32) -> (i32, i32) {
    %c0_i32 = arith.constant 0 : i32
    %c0_i32_0 = arith.constant 0 : i32
    %c0_i32_1 = arith.constant 0 : i32
    return %c0_i32, %c0_i32_0 : i32, i32
  }
  func.func @transform_2(%arg0: i32) -> (i32, i32) {
    %c0_i32 = arith.constant 0 : i32
    %c0_i32_0 = arith.constant 0 : i32
    %c0_i32_1 = arith.constant 0 : i32
    return %c0_i32, %c0_i32_0 : i32, i32
  }
  func.func @transform_3(%arg0: i32) -> (i32, i32) {
    %c0_i32 = arith.constant 0 : i32
    %c0_i32_0 = arith.constant 0 : i32
    %c0_i32_1 = arith.constant 0 : i32
    return %c0_i32, %c0_i32_0 : i32, i32
  }
  func.func @transform_4(%arg0: i32) -> (i32, i32) {
    %c0_i32 = arith.constant 0 : i32
    %c0_i32_0 = arith.constant 0 : i32
    %c0_i32_1 = arith.constant 0 : i32
    return %c0_i32, %c0_i32_0 : i32, i32
  }
  func.func @transform_5(%arg0: i32) -> i32 {
    %c0_i32 = arith.constant 0 : i32
    %c0_i32_0 = arith.constant 0 : i32
    return %c0_i32 : i32
  }
  func.func @transform_6(%arg0: i32) -> (i32, i32) {
    %c0_i32 = arith.constant 0 : i32
    %c0_i32_0 = arith.constant 0 : i32
    return %arg0, %c0_i32 : i32, i32
  }
}

</mosaic_0001>

<llo_original>
// kernel: tpu_custom_call.1
$region0: #{tpu_custom_call.1}
  #allocation0 [shape = 'u32[]', space=smem, size = 0x4, offset = 0x4, fixed_abs, tag = 'smem constant byte address 0x4 - core index']
  #allocation1 [shape = 'u32[72,128]{1,0:T(1,128)}', space=vmem, size = 0x9000, scoped, tag = 'internal scratch']
  #allocation2 [shape = 'f32[1]{0:T(128)S(6)}', space=smem, size = 0x200, scoped, tag = 'scoped memory for tpu_custom_call.1']
  %s0 = inlined_call_operand.vmem [shape: f32[32,256], index: 0, kind: input, shape index: {}]
  %s1 = inlined_call_operand.vmem [shape: f32[256,72], index: 1, kind: input, shape index: {}]
  %s2 = inlined_call_operand.vmem [shape: f32[256,8], index: 2, kind: input, shape index: {}]
  %s3 = inlined_call_operand.vmem [shape: f32[72,8], index: 3, kind: input, shape index: {}]
  %s4 = inlined_call_operand.vmem [shape: f32[72,8], index: 4, kind: input, shape index: {}]
  %s5 = inlined_call_operand.<no memory space> [shape: f32[1], index: 5, kind: input, shape index: {}]
  %s6 = inlined_call_operand.vmem [shape: f32[32,8], index: 6, kind: output, shape index: {}]
  %s7 = sld [smem:[#allocation0]]
  $region57: #{tpu_custom_call.1} parent=0
    _
  %s9 = ssub.s32 1, %s7
  %s10 = scalar_select 0, %s9, %s7
  %11 = sst [smem:[#allocation2]] %s5
  loop: start=0, step=1, limit=4
  $region2: #{tpu_custom_call.1} parent=0 // loop_pre_header
    _
  $region3: #{tpu_custom_call.1} parent=0 // loop_header
    %s13 = sphi 0, %s17
    %p14 = scmp.ge.s32.totalorder %s13, 4
    %s23 = sphi 0, %s25
    %s26 = sphi 0, %s23
    %s27 = sphi 0, %s26
    %s43 = sphi 0, %s27
    %s47 = sphi 0, %s47
    %s49 = sphi 0, %s47
    %s50 = sphi 0, %s49
    %s64 = sphi 0, %s50
    %s68 = sphi 0, %s68
    %s70 = sphi 0, %s68
    %s71 = sphi 0, %s70
    %s85 = sphi 0, %s71
    %s89 = sphi 0, %s89
    %s91 = sphi 0, %s89
    %s92 = sphi 0, %s91
    %s106 = sphi 0, %s92
    %s110 = sphi 0, %s110
    %s112 = sphi 0, %s110
    %s113 = sphi 0, %s112
    %s127 = sphi 0, %s113
    %s131 = sphi 0, %s131
    %s133 = sphi 0, %s131
    %s134 = sphi 0, %s133
    %s148 = sphi 0, %s134
    %s154 = sphi 0, %s156
    %s157 = sphi 0, %s154
    %s158 = sphi 0, %s157
    %s174 = sphi 0, %s158
  $region4: #{tpu_custom_call.1} parent=0 // loop_header_branch
    %16 = sbr.rel (%p14) target = $region8
  $region5: #{tpu_custom_call.1} parent=0 // loop_body
    %s18 = ssub.s32 %s13, 1
    %s19 = ssub.s32 %s13, 2
    %s20 = sadd.s32 %s13, 1
    %s21 = ssub.s32 %s13, %s20
    %p22 = scmp.eq.s32.totalorder %s21, 0
    %s24 = sadd.s32 %s23, 1
    %s25 = scalar_select %p22, %s23, %s24
    %p28 = pneg %p22
    %p29 = scmp.eq.s32.totalorder %s13, 1
    %p30 = por %p28, %p29
    %p31 = scmp.ne.s32.totalorder %s23, %s26
    %p32 = scmp.eq.s32.totalorder %s13, 0
    %p33 = por %p31, %p32
    %p34 = scmp.ne.s32.totalorder %s23, %s26
    %p35 = scmp.eq.s32.totalorder %s18, 1
    %p36 = por %p34, %p35
    %p37 = scmp.ne.s32.totalorder %s26, %s27
    %p38 = scmp.eq.s32.totalorder %s18, 0
    %p39 = por %p37, %p38
    %p40 = scmp.ne.s32.totalorder %s26, %s27
    %p41 = scmp.eq.s32.totalorder %s19, 1
    %p42 = por %p40, %p41
    %p44 = scmp.ne.s32.totalorder %s27, %s43
    %p45 = scmp.eq.s32.totalorder %s19, 0
    %p46 = por %p44, %p45
    %s48 = sadd.s32 %s47, 1
    %p51 = scmp.eq.s32.totalorder %s13, 1
    %p52 = scmp.ne.s32.totalorder %s47, %s49
    %p53 = scmp.eq.s32.totalorder %s13, 0
    %p54 = por %p52, %p53
    %p55 = scmp.ne.s32.totalorder %s47, %s49
    %p56 = scmp.eq.s32.totalorder %s18, 1
    %p57 = por %p55, %p56
    %p58 = scmp.ne.s32.totalorder %s49, %s50
    %p59 = scmp.eq.s32.totalorder %s18, 0
    %p60 = por %p58, %p59
    %p61 = scmp.ne.s32.totalorder %s49, %s50
    %p62 = scmp.eq.s32.totalorder %s19, 1
    %p63 = por %p61, %p62
    %p65 = scmp.ne.s32.totalorder %s50, %s64
    %p66 = scmp.eq.s32.totalorder %s19, 0
    %p67 = por %p65, %p66
    %s69 = sadd.s32 %s68, 1
    %p72 = scmp.eq.s32.totalorder %s13, 1
    %p73 = scmp.ne.s32.totalorder %s68, %s70
    %p74 = scmp.eq.s32.totalorder %s13, 0
    %p75 = por %p73, %p74
    %p76 = scmp.ne.s32.totalorder %s68, %s70
    %p77 = scmp.eq.s32.totalorder %s18, 1
    %p78 = por %p76, %p77
    %p79 = scmp.ne.s32.totalorder %s70, %s71
    %p80 = scmp.eq.s32.totalorder %s18, 0
    %p81 = por %p79, %p80
    %p82 = scmp.ne.s32.totalorder %s70, %s71
    %p83 = scmp.eq.s32.totalorder %s19, 1
    %p84 = por %p82, %p83
    %p86 = scmp.ne.s32.totalorder %s71, %s85
    %p87 = scmp.eq.s32.totalorder %s19, 0
    %p88 = por %p86, %p87
    %s90 = sadd.s32 %s89, 1
    %p93 = scmp.eq.s32.totalorder %s13, 1
    %p94 = scmp.ne.s32.totalorder %s89, %s91
    %p95 = scmp.eq.s32.totalorder %s13, 0
    %p96 = por %p94, %p95
    %p97 = scmp.ne.s32.totalorder %s89, %s91
    %p98 = scmp.eq.s32.totalorder %s18, 1
    %p99 = por %p97, %p98
    %p100 = scmp.ne.s32.totalorder %s91, %s92
    %p101 = scmp.eq.s32.totalorder %s18, 0
    %p102 = por %p100, %p101
    %p103 = scmp.ne.s32.totalorder %s91, %s92
    %p104 = scmp.eq.s32.totalorder %s19, 1
    %p105 = por %p103, %p104
    %p107 = scmp.ne.s32.totalorder %s92, %s106
    %p108 = scmp.eq.s32.totalorder %s19, 0
    %p109 = por %p107, %p108
    %s111 = sadd.s32 %s110, 1
    %p114 = scmp.eq.s32.totalorder %s13, 1
    %p115 = scmp.ne.s32.totalorder %s110, %s112
    %p116 = scmp.eq.s32.totalorder %s13, 0
    %p117 = por %p115, %p116
    %p118 = scmp.ne.s32.totalorder %s110, %s112
    %p119 = scmp.eq.s32.totalorder %s18, 1
    %p120 = por %p118, %p119
    %p121 = scmp.ne.s32.totalorder %s112, %s113
    %p122 = scmp.eq.s32.totalorder %s18, 0
    %p123 = por %p121, %p122
    %p124 = scmp.ne.s32.totalorder %s112, %s113
    %p125 = scmp.eq.s32.totalorder %s19, 1
    %p126 = por %p124, %p125
    %p128 = scmp.ne.s32.totalorder %s113, %s127
    %p129 = scmp.eq.s32.totalorder %s19, 0
    %p130 = por %p128, %p129
    %s132 = sadd.s32 %s131, 1
    %p135 = scmp.eq.s32.totalorder %s13, 1
    %p136 = scmp.ne.s32.totalorder %s131, %s133
    %p137 = scmp.eq.s32.totalorder %s13, 0
    %p138 = por %p136, %p137
    %p139 = scmp.ne.s32.totalorder %s131, %s133
    %p140 = scmp.eq.s32.totalorder %s18, 1
    %p141 = por %p139, %p140
    %p142 = scmp.ne.s32.totalorder %s133, %s134
    %p143 = scmp.eq.s32.totalorder %s18, 0
    %p144 = por %p142, %p143
    %p145 = scmp.ne.s32.totalorder %s133, %s134
    %p146 = scmp.eq.s32.totalorder %s19, 1
    %p147 = por %p145, %p146
    %p149 = scmp.ne.s32.totalorder %s134, %s148
    %p150 = scmp.eq.s32.totalorder %s19, 0
    %p151 = por %p149, %p150
    %s152 = ssub.s32 %s13, %s20
    %p153 = scmp.eq.s32.totalorder %s152, 0
    %s155 = sadd.s32 %s154, 1
    %s156 = scalar_select %p153, %s154, %s155
    %p159 = pneg %p153
    %p160 = scmp.eq.s32.totalorder %s13, 1
    %p161 = por %p159, %p160
    %p162 = scmp.ne.s32.totalorder %s154, %s157
    %p163 = scmp.eq.s32.totalorder %s13, 0
    %p164 = por %p162, %p163
    %p165 = scmp.ne.s32.totalorder %s154, %s157
    %p166 = scmp.eq.s32.totalorder %s18, 1
    %p167 = por %p165, %p166
    %p168 = scmp.ne.s32.totalorder %s157, %s158
    %p169 = scmp.eq.s32.totalorder %s18, 0
    %p170 = por %p168, %p169
    %p171 = scmp.ne.s32.totalorder %s157, %s158
    %p172 = scmp.eq.s32.totalorder %s19, 1
    %p173 = por %p171, %p172
    %p175 = scmp.ne.s32.totalorder %s158, %s174
    %p176 = scmp.eq.s32.totalorder %s19, 0
    %p177 = por %p175, %p176
    %p178 = scmp.le.s32.totalorder 1, %s13
    %p179 = scmp.lt.s32.totalorder %s13, 3
    %p180 = pnand %p178, %p179
    %p181 = pneg %p180
    // Predicated region
    $region9: #{tpu_custom_call.1} parent=5 // pred_check
      _
    $region10: #{tpu_custom_call.1} parent=5 // pred_check_branch
      %183 = sbr.rel (%p180) target = $region12
    $region11: #{tpu_custom_call.1} parent=5 // pred_region
      %s184 = ssub.s32 %s13, 1
      // Predicated region
      $region13: #{tpu_custom_call.1} parent=11 // pred_check
        %p185 = pneg %p60
      $region14: #{tpu_custom_call.1} parent=11 // pred_check_branch
        %187 = sbr.rel (%p185) target = $region16
      $region15: #{tpu_custom_call.1} parent=11 // pred_region
        _
      $region16: #{tpu_custom_call.1} parent=11 // pred_fallthru
        _
      // Predicated region
      $region17: #{tpu_custom_call.1} parent=11 // pred_check
        %p188 = pneg %p81
      $region18: #{tpu_custom_call.1} parent=11 // pred_check_branch
        %190 = sbr.rel (%p188) target = $region20
      $region19: #{tpu_custom_call.1} parent=11 // pred_region
        _
      $region20: #{tpu_custom_call.1} parent=11 // pred_fallthru
        _
      // Predicated region
      $region21: #{tpu_custom_call.1} parent=11 // pred_check
        %p191 = pneg %p102
      $region22: #{tpu_custom_call.1} parent=11 // pred_check_branch
        %193 = sbr.rel (%p191) target = $region24
      $region23: #{tpu_custom_call.1} parent=11 // pred_region
        _
      $region24: #{tpu_custom_call.1} parent=11 // pred_fallthru
        _
      // Predicated region
      $region25: #{tpu_custom_call.1} parent=11 // pred_check
        %p194 = pneg %p123
      $region26: #{tpu_custom_call.1} parent=11 // pred_check_branch
        %196 = sbr.rel (%p194) target = $region28
      $region27: #{tpu_custom_call.1} parent=11 // pred_region
        _
      $region28: #{tpu_custom_call.1} parent=11 // pred_fallthru
        _
      // Predicated region
      $region29: #{tpu_custom_call.1} parent=11 // pred_check
        %p197 = pneg %p144
      $region30: #{tpu_custom_call.1} parent=11 // pred_check_branch
        %199 = sbr.rel (%p197) target = $region32
      $region31: #{tpu_custom_call.1} parent=11 // pred_region
        _
      $region32: #{tpu_custom_call.1} parent=11 // pred_fallthru
        _
    $region12: #{tpu_custom_call.1} parent=5 // pred_fallthru
      _
    %p200 = scmp.lt.s32.totalorder %s13, 2
    // Predicated region
    $region33: #{tpu_custom_call.1} parent=5 // pred_check
      %p201 = pneg %p200
    $region34: #{tpu_custom_call.1} parent=5 // pred_check_branch
      %203 = sbr.rel (%p201) target = $region36
    $region35: #{tpu_custom_call.1} parent=5 // pred_region
      // Predicated region
      $region37: #{tpu_custom_call.1} parent=35 // pred_check
        %p204 = pneg %p33
      $region38: #{tpu_custom_call.1} parent=35 // pred_check_branch
        %206 = sbr.rel (%p204) target = $region40
      $region39: #{tpu_custom_call.1} parent=35 // pred_region
        %s207 = smul.u32 2, %s13
        %p208 = scmp.lt.s32.totalorder %s207, 3
        %s209 = scalar_select %p208, %s207, 3
        %s210 = smul.addr %s209, 2
        %s211 = smul.addr %s210, 8
        %s212 = scalar_lea.vmem %s0, %s211
        %s213 = smul.u32 2, %s13
      $region40: #{tpu_custom_call.1} parent=35 // pred_fallthru
        _
    $region36: #{tpu_custom_call.1} parent=5 // pred_fallthru
      _
    %p214 = scmp.le.s32.totalorder 1, %s13
    %p215 = scmp.lt.s32.totalorder %s13, 3
    %p216 = pnand %p214, %p215
    %p217 = pneg %p216
    // Predicated region
    $region41: #{tpu_custom_call.1} parent=5 // pred_check
      _
    $region42: #{tpu_custom_call.1} parent=5 // pred_check_branch
      %219 = sbr.rel (%p216) target = $region44
    $region43: #{tpu_custom_call.1} parent=5 // pred_region
      %s220 = ssub.s32 %s13, 1
      %s221 = smul.u32 2, %s18
      %p222 = scmp.lt.s32.totalorder %s221, 3
      %s223 = scalar_select %p222, %s221, 3
      %s224 = smul.addr %s223, 2
      %s225 = smul.addr %s224, 8
      %s226 = scalar_lea.vmem %s0, %s225
      %p227 = pneg %p39
      %p228 = pneg %p36
      %p229 = pneg %p60
      %p230 = pneg %p57
      %p231 = pneg %p81
      %p232 = pneg %p78
      %p233 = pneg %p102
      %p234 = pneg %p99
      %p235 = pneg %p123
      %p236 = pneg %p120
      %p237 = pneg %p144
      %p238 = pneg %p141
      %p239 = pneg %p170
      %p240 = pneg %p167
      %s241 = smul.u32 2, %s18
      %p242 = scmp.lt.s32.totalorder %s241, 3
      %s243 = scalar_select %p242, %s241, 3
      %s244 = smul.addr %s243, 8
      %s245 = scalar_lea.vmem %s6, %s244
      %s246 = smul.u32 2, %s18
      %p247 = scmp.lt.s32.totalorder %s246, 3
      %s248 = scalar_select %p247, %s246, 3
      %s249 = smul.addr %s248, 2
      %s250 = smul.addr %s249, 8
      %s251 = scalar_lea.vmem %s0, %s250
      %s252 = smul.u32 2, %s18
      %s253 = smul.u32 2, %s18
      %p254 = scmp.lt.s32.totalorder %s253, 3
      %s255 = scalar_select %p254, %s253, 3
      %s256 = smul.addr %s255, 8
      %s257 = scalar_lea.vmem %s6, %s256
      %s258 = smul.u32 2, %s18
      %v259 = vld [vmem:[%s251] sm:$0xff]
      %v260 = vld [vmem:[%s251 + $0x8] sm:$0xff]
      %v261 = vld [vmem:[%s251 + $0x10] sm:$0xff]
      %v262 = vld [vmem:[%s251 + $0x18] sm:$0xff]
      %v263 = vld [vmem:[%s1] sm:$0xff]
      %v264 = vld [vmem:[%s1 + $0x8] sm:$0xff]
      %v265 = vld [vmem:[%s1 + $0x10] sm:$0xff]
      %v266 = vld [vmem:[%s1 + $0x18] sm:$0xff]
      %v267 = vld [vmem:[%s1 + $0x20] sm:$0xff]
      %v268 = vld [vmem:[%s1 + $0x28] sm:$0xff]
      %v269 = vld [vmem:[%s1 + $0x30] sm:$0xff]
      %v270 = vld [vmem:[%s1 + $0x38] sm:$0xff]
      %v271 = vld [vmem:[%s1 + $0x40] sm:$0xff]
      %v272 = vld [vmem:[%s1 + $0x48] sm:$0xff]
      %v273 = vld [vmem:[%s1 + $0x50] sm:$0xff]
      %v274 = vld [vmem:[%s1 + $0x58] sm:$0xff]
      %v275 = vld [vmem:[%s1 + $0x60] sm:$0xff]
      %v276 = vld [vmem:[%s1 + $0x68] sm:$0xff]
      %v277 = vld [vmem:[%s1 + $0x70] sm:$0xff]
      %v278 = vld [vmem:[%s1 + $0x78] sm:$0xff]
      %v279 = vld [vmem:[%s1 + $0x80] sm:$0xff]
      %v280 = vld [vmem:[%s1 + $0x88] sm:$0xff]
      %v281 = vld [vmem:[%s1 + $0x90] sm:$0xff]
      %v282 = vld [vmem:[%s1 + $0x98] sm:$0xff]
      %v283 = vld [vmem:[%s1 + $0xa0] sm:$0xff]
      %v284 = vld [vmem:[%s1 + $0xa8] sm:$0xff]
      %v285 = vld [vmem:[%s1 + $0xb0] sm:$0xff]
      %v286 = vld [vmem:[%s1 + $0xb8] sm:$0xff]
      %v287 = vld [vmem:[%s1 + $0xc0] sm:$0xff]
      %v288 = vld [vmem:[%s1 + $0xc8] sm:$0xff]
      %v289 = vld [vmem:[%s1 + $0xd0] sm:$0xff]
      %v290 = vld [vmem:[%s1 + $0xd8] sm:$0xff]
      %v291 = vld [vmem:[%s1 + $0xe0] sm:$0xff]
      %v292 = vld [vmem:[%s1 + $0xe8] sm:$0xff]
      %v293 = vld [vmem:[%s1 + $0xf0] sm:$0xff]
      %v294 = vld [vmem:[%s1 + $0xf8] sm:$0xff]
      %295 = vmatpush.msra.mxu0 %v278
      %296 = vmatpush.msra.mxu0 %v277
      %297 = vmatpush.msra.mxu0 %v276
      %298 = vmatpush.msra.mxu0 %v275
      %299 = vmatpush.msra.mxu0 %v274
      %300 = vmatpush.msra.mxu0 %v273
      %301 = vmatpush.msra.mxu0 %v272
      %302 = vmatpush.msra.mxu0 %v271
      %303 = vmatpush.msra.mxu0 %v270
      %304 = vmatpush.msra.mxu0 %v269
      %305 = vmatpush.msra.mxu0 %v268
      %306 = vmatpush.msra.mxu0 %v267
      %307 = vmatpush.msra.mxu0 %v266
      %308 = vmatpush.msra.mxu0 %v265
      %309 = vmatpush.msra.mxu0 %v264
      %310 = vmatpush.msra.mxu0 %v263
      %311 = vmatmul.f32.gmra.mxu0 %v259
      %v312 = vpop.f32.mrf.mxu0
      %v313 = vadd.f32 0.0, %v312
      %314 = vmatmul.f32.gmra.mxu0 %v261
      %v315 = vpop.f32.mrf.mxu0
      %v316 = vadd.f32 0.0, %v315
      %317 = vdwg.mxu0
      %318 = vmatpush.msra.mxu0 %v294
      %319 = vmatpush.msra.mxu0 %v293
      %320 = vmatpush.msra.mxu0 %v292
      %321 = vmatpush.msra.mxu0 %v291
      %322 = vmatpush.msra.mxu0 %v290
      %323 = vmatpush.msra.mxu0 %v289
      %324 = vmatpush.msra.mxu0 %v288
      %325 = vmatpush.msra.mxu0 %v287
      %326 = vmatpush.msra.mxu0 %v286
      %327 = vmatpush.msra.mxu0 %v285
      %328 = vmatpush.msra.mxu0 %v284
      %329 = vmatpush.msra.mxu0 %v283
      %330 = vmatpush.msra.mxu0 %v282
      %331 = vmatpush.msra.mxu0 %v281
      %332 = vmatpush.msra.mxu0 %v280
      %333 = vmatpush.msra.mxu0 %v279
      %334 = vmatmul.f32.gmra.mxu0 %v260
      %v335 = vpop.f32.mrf.mxu0
      %v336 = vadd.f32 %v313, %v335
      %337 = vmatmul.f32.gmra.mxu0 %v262
      %v338 = vpop.f32.mrf.mxu0
      %v339 = vadd.f32 %v316, %v338
      %340 = vdwg.mxu0
      %v341 = vmul.f32 %v259, %v259
      %v342 = vmul.f32 %v260, %v260
      %v343 = vmul.f32 %v261, %v261
      %v344 = vmul.f32 %v262, %v262
      %v345 = vld [vmem:[%s2] sm:$0xff]
      %v346 = vld [vmem:[%s2 + $0x8] sm:$0xff]
      %v347 = vld [vmem:[%s2 + $0x10] sm:$0xff]
      %v348 = vld [vmem:[%s2 + $0x18] sm:$0xff]
      %v349 = vld [vmem:[%s2 + $0x20] sm:$0xff]
      %v350 = vld [vmem:[%s2 + $0x28] sm:$0xff]
      %v351 = vld [vmem:[%s2 + $0x30] sm:$0xff]
      %v352 = vld [vmem:[%s2 + $0x38] sm:$0xff]
      %v353 = vld [vmem:[%s2 + $0x40] sm:$0xff]
      %v354 = vld [vmem:[%s2 + $0x48] sm:$0xff]
      %v355 = vld [vmem:[%s2 + $0x50] sm:$0xff]
      %v356 = vld [vmem:[%s2 + $0x58] sm:$0xff]
      %v357 = vld [vmem:[%s2 + $0x60] sm:$0xff]
      %v358 = vld [vmem:[%s2 + $0x68] sm:$0xff]
      %v359 = vld [vmem:[%s2 + $0x70] sm:$0xff]
      %v360 = vld [vmem:[%s2 + $0x78] sm:$0xff]
      %v361 = vld [vmem:[%s2 + $0x80] sm:$0xff]
      %v362 = vld [vmem:[%s2 + $0x88] sm:$0xff]
      %v363 = vld [vmem:[%s2 + $0x90] sm:$0xff]
      %v364 = vld [vmem:[%s2 + $0x98] sm:$0xff]
      %v365 = vld [vmem:[%s2 + $0xa0] sm:$0xff]
      %v366 = vld [vmem:[%s2 + $0xa8] sm:$0xff]
      %v367 = vld [vmem:[%s2 + $0xb0] sm:$0xff]
      %v368 = vld [vmem:[%s2 + $0xb8] sm:$0xff]
      %v369 = vld [vmem:[%s2 + $0xc0] sm:$0xff]
      %v370 = vld [vmem:[%s2 + $0xc8] sm:$0xff]
      %v371 = vld [vmem:[%s2 + $0xd0] sm:$0xff]
      %v372 = vld [vmem:[%s2 + $0xd8] sm:$0xff]
      %v373 = vld [vmem:[%s2 + $0xe0] sm:$0xff]
      %v374 = vld [vmem:[%s2 + $0xe8] sm:$0xff]
      %v375 = vld [vmem:[%s2 + $0xf0] sm:$0xff]
      %v376 = vld [vmem:[%s2 + $0xf8] sm:$0xff]
      %377 = vmatpush.msra.mxu0 %v360
      %378 = vmatpush.msra.mxu0 %v359
      %379 = vmatpush.msra.mxu0 %v358
      %380 = vmatpush.msra.mxu0 %v357
      %381 = vmatpush.msra.mxu0 %v356
      %382 = vmatpush.msra.mxu0 %v355
      %383 = vmatpush.msra.mxu0 %v354
      %384 = vmatpush.msra.mxu0 %v353
      %385 = vmatpush.msra.mxu0 %v352
      %386 = vmatpush.msra.mxu0 %v351
      %387 = vmatpush.msra.mxu0 %v350
      %388 = vmatpush.msra.mxu0 %v349
      %389 = vmatpush.msra.mxu0 %v348
      %390 = vmatpush.msra.mxu0 %v347
      %391 = vmatpush.msra.mxu0 %v346
      %392 = vmatpush.msra.mxu0 %v345
      %393 = vmatmul.f32.gmra.mxu0 %v341
      %v394 = vpop.f32.mrf.mxu0
      %v395 = vadd.f32 0.0, %v394
      %396 = vmatmul.f32.gmra.mxu0 %v343
      %v397 = vpop.f32.mrf.mxu0
      %v398 = vadd.f32 0.0, %v397
      %399 = vdwg.mxu0
      %400 = vmatpush.msra.mxu0 %v376
      %401 = vmatpush.msra.mxu0 %v375
      %402 = vmatpush.msra.mxu0 %v374
      %403 = vmatpush.msra.mxu0 %v373
      %404 = vmatpush.msra.mxu0 %v372
      %405 = vmatpush.msra.mxu0 %v371
      %406 = vmatpush.msra.mxu0 %v370
      %407 = vmatpush.msra.mxu0 %v369
      %408 = vmatpush.msra.mxu0 %v368
      %409 = vmatpush.msra.mxu0 %v367
      %410 = vmatpush.msra.mxu0 %v366
      %411 = vmatpush.msra.mxu0 %v365
      %412 = vmatpush.msra.mxu0 %v364
      %413 = vmatpush.msra.mxu0 %v363
      %414 = vmatpush.msra.mxu0 %v362
      %415 = vmatpush.msra.mxu0 %v361
      %416 = vmatmul.f32.gmra.mxu0 %v342
      %v417 = vpop.f32.mrf.mxu0
      %v418 = vadd.f32 %v395, %v417
      %419 = vmatmul.f32.gmra.mxu0 %v344
      %v420 = vpop.f32.mrf.mxu0
      %v421 = vadd.f32 %v398, %v420
      %422 = vdwg.mxu0
      %v423 = vmul.f32 %v336, %v336
      %v424 = vmul.f32 %v339, %v339
      %v425 = vld [vmem:[%s3] sm:$0xff]
      %v426 = vld [vmem:[%s3 + $0x8] sm:$0xff]
      %v427 = vld [vmem:[%s3 + $0x10] sm:$0xff]
      %v428 = vld [vmem:[%s3 + $0x18] sm:$0xff]
      %v429 = vld [vmem:[%s3 + $0x20] sm:$0xff]
      %v430 = vld [vmem:[%s3 + $0x28] sm:$0xff]
      %v431 = vld [vmem:[%s3 + $0x30] sm:$0xff]
      %v432 = vld [vmem:[%s3 + $0x38] sm:$0xff]
      %v433 = vld [vmem:[%s3 + $0x40] sm:$0xff]
      %v434 = vld [vmem:[%s4] sm:$0xff]
      %v435 = vld [vmem:[%s4 + $0x8] sm:$0xff]
      %v436 = vld [vmem:[%s4 + $0x10] sm:$0xff]
      %v437 = vld [vmem:[%s4 + $0x18] sm:$0xff]
      %v438 = vld [vmem:[%s4 + $0x20] sm:$0xff]
      %v439 = vld [vmem:[%s4 + $0x28] sm:$0xff]
      %v440 = vld [vmem:[%s4 + $0x30] sm:$0xff]
      %v441 = vld [vmem:[%s4 + $0x38] sm:$0xff]
      %v442 = vld [vmem:[%s4 + $0x40] sm:$0xff]
      %vm443 = vcmask 588800
      %v445 = vsel %vm443, %v336, 0
      %v448 = vsel %vm443, %v339, 0
      %450 = vmatpush.msra.mxu0 0.0
      %451 = vmatpush.msra.mxu0 0.0
      %452 = vmatpush.msra.mxu0 0.0
      %453 = vmatpush.msra.mxu0 0.0
      %454 = vmatpush.msra.mxu0 0.0
      %455 = vmatpush.msra.mxu0 0.0
      %456 = vmatpush.msra.mxu0 0.0
      %457 = vmatpush.msra.mxu0 %v442
      %458 = vmatpush.msra.mxu0 %v441
      %459 = vmatpush.msra.mxu0 %v440
      %460 = vmatpush.msra.mxu0 %v439
      %461 = vmatpush.msra.mxu0 %v438
      %462 = vmatpush.msra.mxu0 %v437
      %463 = vmatpush.msra.mxu0 %v436
      %464 = vmatpush.msra.mxu0 %v435
      %465 = vmatpush.msra.mxu0 %v434
      %466 = vmatmul.f32.gmra.mxu0 %v445
      %v467 = vpop.f32.mrf.mxu0
      %v468 = vadd.f32 0.0, %v467
      %469 = vmatmul.f32.gmra.mxu0 %v448
      %v470 = vpop.f32.mrf.mxu0
      %v471 = vadd.f32 0.0, %v470
      %472 = vdwg.mxu0
      %v474 = vsel %vm443, %v423, 0
      %v477 = vsel %vm443, %v424, 0
      %479 = vmatpush.msra.mxu0 0.0
      %480 = vmatpush.msra.mxu0 0.0
      %481 = vmatpush.msra.mxu0 0.0
      %482 = vmatpush.msra.mxu0 0.0
      %483 = vmatpush.msra.mxu0 0.0
      %484 = vmatpush.msra.mxu0 0.0
      %485 = vmatpush.msra.mxu0 0.0
      %486 = vmatpush.msra.mxu0 %v433
      %487 = vmatpush.msra.mxu0 %v432
      %488 = vmatpush.msra.mxu0 %v431
      %489 = vmatpush.msra.mxu0 %v430
      %490 = vmatpush.msra.mxu0 %v429
      %491 = vmatpush.msra.mxu0 %v428
      %492 = vmatpush.msra.mxu0 %v427
      %493 = vmatpush.msra.mxu0 %v426
      %494 = vmatpush.msra.mxu0 %v425
      %495 = vmatmul.f32.gmra.mxu0 %v474
      %v496 = vpop.f32.mrf.mxu0
      %v497 = vadd.f32 %v418, %v496
      %498 = vmatmul.f32.gmra.mxu0 %v477
      %v499 = vpop.f32.mrf.mxu0
      %v500 = vadd.f32 %v421, %v499
      %501 = vdwg.mxu0
      %v502 = vadd.f32 %v497, %v468
      %v503 = vadd.f32 %v500, %v471
      %s504 = sld [smem:[#allocation2]]
      %v505 = vstv %s504
      %v506 = vadd.f32 %v502, %v505
      %v507 = vadd.f32 %v503, %v505
      %vm508 = vcmask 64512
      %509 = vst.msk [vmem:[%s257] sm:$0xff] %vm508, %v506
      %510 = vst.msk [vmem:[%s257 + $0x8] sm:$0xff] %vm508, %v507
      %s511 = smul.u32 2, %s18
      %p512 = scmp.lt.s32.totalorder %s511, 3
      %s513 = scalar_select %p512, %s511, 3
      %s514 = smul.addr %s513, 8
      %s515 = scalar_lea.vmem %s6, %s514
      // Predicated region
      $region45: #{tpu_custom_call.1} parent=43 // pred_check
        %p516 = pneg %p167
      $region46: #{tpu_custom_call.1} parent=43 // pred_check_branch
        %518 = sbr.rel (%p516) target = $region48
      $region47: #{tpu_custom_call.1} parent=43 // pred_region
        %s519 = smul.u32 2, %s18
      $region48: #{tpu_custom_call.1} parent=43 // pred_fallthru
        _
    $region44: #{tpu_custom_call.1} parent=5 // pred_fallthru
      _
    %p520 = scmp.le.s32.totalorder 2, %s13
    // Predicated region
    $region49: #{tpu_custom_call.1} parent=5 // pred_check
      %p521 = pneg %p520
    $region50: #{tpu_custom_call.1} parent=5 // pred_check_branch
      %523 = sbr.rel (%p521) target = $region52
    $region51: #{tpu_custom_call.1} parent=5 // pred_region
      %s524 = ssub.s32 %s13, 2
      // Predicated region
      $region53: #{tpu_custom_call.1} parent=51 // pred_check
        %p525 = pneg %p173
      $region54: #{tpu_custom_call.1} parent=51 // pred_check_branch
        %527 = sbr.rel (%p525) target = $region56
      $region55: #{tpu_custom_call.1} parent=51 // pred_region
        %s528 = smul.u32 2, %s19
        %p529 = scmp.lt.s32.totalorder %s528, 3
        %s530 = scalar_select %p529, %s528, 3
        %s531 = smul.addr %s530, 8
        %s532 = scalar_lea.vmem %s6, %s531
      $region56: #{tpu_custom_call.1} parent=51 // pred_fallthru
        _
    $region52: #{tpu_custom_call.1} parent=5 // pred_fallthru
      _
  $region6: #{tpu_custom_call.1} parent=0 // loop_footer
    %s17 = sadd.s32 1, %s13
  $region7: #{tpu_custom_call.1} parent=0 // loop_footer_branch
    %12 = sbr.rel target = $region3
  $region8: #{tpu_custom_call.1} parent=0 // loop_exit
    _

</llo_original>
